<compile_context>
chip_gen: v5e
topology: v5e:2x2
jax: 0.10.0
libtpu: 0.0.40
codegen_flags: <defaults>
</compile_context>

<pallas_src>
import math

import jax
import jax.numpy as jnp
from jax.experimental import pallas as pl
from jax.experimental.pallas import tpu as pltpu


# Per-tile byte target for each streaming array (x / out). With double-buffered
# x, pe, out this keeps the pipelined footprint ~12 MiB, inside every
# generation's scoped-VMEM budget (including v7x's 64 MiB physical VMEM).
_TARGET_TILE_BYTES = 2 * 1024 * 1024
_VMEM_LIMIT_BYTES = 32 * 1024 * 1024


def make_positional_encoding_table(dim: int, max_len: int = 512) -> jnp.ndarray:
    """Deterministic sinusoidal PE buffer, shape (1, max_len, dim)."""
    position = jnp.arange(0, max_len, dtype=jnp.float32)[:, None]          # (max_len, 1)
    div_term = jnp.exp(
        jnp.arange(0, dim, 2, dtype=jnp.float32) * -(math.log(10000.0) / dim)
    )                                                                       # (ceil(dim/2),)
    pe = jnp.zeros((max_len, dim), dtype=jnp.float32)
    pe = pe.at[:, 0::2].set(jnp.sin(position * div_term))
    pe = pe.at[:, 1::2].set(jnp.cos(position * div_term)[:, : dim // 2])    # odd-D safe
    return pe[None]                                                         # (1, max_len, dim)


def _pos_enc_kernel(x_ref, pe_ref, spk_ref, o_ref):
    # x_ref:  (TB, TL, Df) tile of x for the current (L-tile, batch-tile) point
    # pe_ref: (1,  TL, Df) positional-encoding tile; invariant across the inner
    #         batch-tile axis -> stays VMEM-resident; broadcast over TB (VPU).
    # spk_ref:(TB, 1,  Df) speaker embedding; broadcast over the TL seq rows.
    o_ref[...] = x_ref[...] + pe_ref[...] + spk_ref[...]


def positional_encoding_forward(x: jnp.ndarray,
                                speaker_emb: jnp.ndarray,
                                pe: jnp.ndarray) -> jnp.ndarray:
    """x: (B, L, D), speaker_emb: (B, 1, D), pe: (1, max_len, D). All float32."""
    B, L, D = x.shape
    max_len = pe.shape[1]

    # ---- lane folding: make the last dim a multiple of 128 when possible ----
    # Folding G consecutive sequence rows into the lane dim is a contiguous
    # (free) reshape for x / pe / out; the speaker vector is tiled G times
    # (tiny: B * 128 floats).
    G = 1
    if D % 128 != 0 and 128 % D == 0:
        g = 128 // D
        if L % g == 0 and max_len % g == 0:
            G = g
    Lf, Df, Mf = L // G, D * G, max_len // G

    x_f = x.reshape(B, Lf, Df)
    pe_f = pe.reshape(1, Mf, Df)
    spk_f = jnp.tile(speaker_emb, (1, 1, G)) if G > 1 else speaker_emb      # (B, 1, Df)

    # ---- pick the L-tile size (multiple of 8, up to ~_TARGET_TILE_BYTES) ----
    itemsize = x.dtype.itemsize
    row_bytes = Df * itemsize
    target_rows = max(8, (_TARGET_TILE_BYTES // max(row_bytes, 1)) // 8 * 8)

    if Lf < 8:
        # Block must equal the full (folded) sequence dim; slice pe so its full
        # dim matches too (tiny copy: L * D elements only).
        TL = Lf
        pe_in = pe_f[:, :Lf, :]
    else:
        TL = max(8, min(target_rows, (Lf // 8) * 8))
        pe_in = pe_f  # address the full table directly through the index_map

    # ---- batch-tile: pack several batch elements per grid step when the
    # per-batch (TL, Df) slab is far below the byte budget (amortises the
    # fixed per-grid-step pipeline overhead at small L / D). ----
    TB = int(max(1, min(B, _TARGET_TILE_BYTES // max(TL * row_bytes, 1))))

    num_l = pl.cdiv(Lf, TL)
    num_b = pl.cdiv(B, TB)

    # Grid = (L_tiles, batch_tiles): inner (fastest) axis is the batch, so the
    # pe block — whose index depends only on the L-tile — stays resident across
    # the batch sweep and is fetched from HBM only once per L-tile.
    # TODO(synk): pipeline_mode=pl.Buffered(1) on the pe spec would also drop
    # its second pipeline buffer; left at the default for lowering robustness.
    out_f = pl.pallas_call(
        _pos_enc_kernel,
        out_shape=jax.ShapeDtypeStruct((B, Lf, Df), x.dtype),
        grid=(num_l, num_b),
        in_specs=[
            pl.BlockSpec((TB, TL, Df), lambda l, b: (b, l, 0)),   # x
            pl.BlockSpec((1, TL, Df),  lambda l, b: (0, l, 0)),   # pe (L-tile only)
            pl.BlockSpec((TB, 1, Df),  lambda l, b: (b, 0, 0)),   # speaker_emb
        ],
        out_specs=pl.BlockSpec((TB, TL, Df), lambda l, b: (b, l, 0)),
        compiler_params=pltpu.CompilerParams(
            dimension_semantics=("parallel", "parallel"),
            vmem_limit_bytes=_VMEM_LIMIT_BYTES,
        ),
    )(x_f, pe_in, spk_f)

    return out_f.reshape(B, L, D)


if __name__ == "__main__":
    max_len = 512
    key = jax.random.PRNGKey(0)
    ks = jax.random.split(key, 6)

    def _run_case(B, L, D, kx, kspk):
        x = jax.random.normal(kx, (B, L, D), dtype=jnp.float32)
        spk = jax.random.normal(kspk, (B, 1, D), dtype=jnp.float32)
        pe = make_positional_encoding_table(D, max_len)
        out = jax.block_until_ready(positional_encoding_forward(x, spk, pe))
        ref = x + pe[:, :L, :] + spk
        assert out.shape == (B, L, D)
        assert jnp.allclose(out, ref, atol=1e-6), f"mismatch (B={B}, L={L}, D={D})"

    # Case 1: module defaults scale (D < 128 -> lane folding G=4, single step).
    _run_case(2, 8, 32, ks[0], ks[1])
    # Case 2: lane-dense D (multiple of 128), whole batch packed in one block.
    _run_case(2, 24, 128, ks[2], ks[3])
    # Case 3: lane folding G=2 with two L-tiles (incl. a partial boundary tile)
    # and a 3-element batch tile.
    _run_case(3, 20, 64, ks[4], ks[5])

    print("KERNEL_OK")
</pallas_src>

<mosaic_0001>
module attributes {stable_mosaic.version = 11 : i64} {
  func.func @_pos_enc_kernel(%arg0: i32, %arg1: i32, %arg2: memref<2x2x128xf32, #tpu.memory_space<vmem>>, %arg3: memref<1x2x128xf32, #tpu.memory_space<vmem>>, %arg4: memref<2x1x128xf32, #tpu.memory_space<vmem>>, %arg5: memref<2x2x128xf32, #tpu.memory_space<vmem>>) attributes {dimension_semantics = [#tpu.dimension_semantics<parallel>, #tpu.dimension_semantics<parallel>], iteration_bounds = array<i64: 1, 1>, scalar_prefetch = 0 : i64, scratch_operands = 0 : i64, tpu.core_type = #tpu.core_type<tc>, window_params = [{transform_indices = @transform_0, window_bounds = array<i64: 2, 2, 128>}, {transform_indices = @transform_1, window_bounds = array<i64: 1, 2, 128>}, {transform_indices = @transform_2, window_bounds = array<i64: 2, 1, 128>}, {transform_indices = @transform_3, window_bounds = array<i64: 2, 2, 128>}]} {
    %c0 = arith.constant 0 : index
    %c0_0 = arith.constant 0 : index
    %c0_1 = arith.constant 0 : index
    %0 = vector.load %arg2[%c0, %c0_0, %c0_1] : memref<2x2x128xf32, #tpu.memory_space<vmem>>, vector<2x2x128xf32>
    %c0_2 = arith.constant 0 : index
    %c0_3 = arith.constant 0 : index
    %c0_4 = arith.constant 0 : index
    %1 = vector.load %arg3[%c0_2, %c0_3, %c0_4] : memref<1x2x128xf32, #tpu.memory_space<vmem>>, vector<1x2x128xf32>
    %2 = vector.broadcast %1 : vector<1x2x128xf32> to vector<2x2x128xf32>
    %3 = arith.addf %0, %2 : vector<2x2x128xf32>
    %c0_5 = arith.constant 0 : index
    %c0_6 = arith.constant 0 : index
    %c0_7 = arith.constant 0 : index
    %4 = vector.load %arg4[%c0_5, %c0_6, %c0_7] : memref<2x1x128xf32, #tpu.memory_space<vmem>>, vector<2x1x128xf32>
    %5 = vector.broadcast %4 : vector<2x1x128xf32> to vector<2x2x128xf32>
    %6 = arith.addf %3, %5 : vector<2x2x128xf32>
    %c0_8 = arith.constant 0 : index
    %c0_9 = arith.constant 0 : index
    %c0_10 = arith.constant 0 : index
    %7 = vector.load %arg5[%c0_8, %c0_9, %c0_10] : memref<2x2x128xf32, #tpu.memory_space<vmem>>, vector<2x2x128xf32>
    tpu.vector_store %arg5[%c0_8, %c0_9, %c0_10], %6 {strides = array<i32>} : memref<2x2x128xf32, #tpu.memory_space<vmem>>, vector<2x2x128xf32>,
    return
  }
  func.func @transform_0(%arg0: i32, %arg1: i32) -> (i32, i32, i32) {
    %c0_i32 = arith.constant 0 : i32
    %c0_i32_0 = arith.constant 0 : i32
    return %arg1, %arg0, %c0_i32 : i32, i32, i32
  }
  func.func @transform_1(%arg0: i32, %arg1: i32) -> (i32, i32, i32) {
    %c0_i32 = arith.constant 0 : i32
    %c0_i32_0 = arith.constant 0 : i32
    %c0_i32_1 = arith.constant 0 : i32
    return %c0_i32, %arg0, %c0_i32_0 : i32, i32, i32
  }
  func.func @transform_2(%arg0: i32, %arg1: i32) -> (i32, i32, i32) {
    %c0_i32 = arith.constant 0 : i32
    %c0_i32_0 = arith.constant 0 : i32
    %c0_i32_1 = arith.constant 0 : i32
    return %arg1, %c0_i32, %c0_i32_0 : i32, i32, i32
  }
  func.func @transform_3(%arg0: i32, %arg1: i32) -> (i32, i32, i32) {
    %c0_i32 = arith.constant 0 : i32
    %c0_i32_0 = arith.constant 0 : i32
    return %arg1, %arg0, %c0_i32 : i32, i32, i32
  }
}

</mosaic_0001>

<llo_original>
// kernel: tpu_custom_call.1
$region0: #{tpu_custom_call.1}
  #allocation0 [shape = 'u32[]', space=smem, size = 0x4, offset = 0x4, fixed_abs, tag = 'smem constant byte address 0x4 - core index']
  #allocation1 [shape = 'u32[72,128]{1,0:T(1,128)}', space=vmem, size = 0x9000, scoped, tag = 'internal scratch']
  %s0 = inlined_call_operand.hbm [shape: f32[2,2,128], index: 0, kind: input, shape index: {}]
  %s1 = inlined_call_operand.hbm [shape: f32[1,2,128], index: 1, kind: input, shape index: {}]
  %s2 = inlined_call_operand.hbm [shape: f32[2,1,128], index: 2, kind: input, shape index: {}]
  %s3 = inlined_call_operand.hbm [shape: f32[2,2,128], index: 3, kind: output, shape index: {}]
  %s4 = sld [smem:[#allocation0]]
  $region34: #{tpu_custom_call.1} parent=0
    _
  %s6 = ssub.s32 1, %s4
  %s7 = scalar_select 0, %s6, %s4
  $region1: #{tpu_custom_call.1} parent=0
    #allocation2 [shape = 'u8[2048]{0}', space=vmem, size = 0x800, scoped, tag = 'input window, operand 0, single buffered']
    #allocation3 [shape = 's32[1]{0}', space=sflag, size = 0x4, scoped, tag = 'scoped memory for tpu_custom_call.1']
    #allocation4 [shape = 's32[1]{0}', space=sflag, size = 0x4, scoped, tag = 'scoped memory for tpu_custom_call.1']
    #allocation5 [shape = 'u8[1024]{0}', space=vmem, size = 0x400, scoped, tag = 'input window, operand 1, single buffered']
    #allocation6 [shape = 's32[1]{0}', space=sflag, size = 0x4, scoped, tag = 'scoped memory for tpu_custom_call.1']
    #allocation7 [shape = 'u8[1024]{0}', space=vmem, size = 0x400, scoped, tag = 'input window, operand 2, single buffered']
    #allocation8 [shape = 'u8[2048]{0}', space=vmem, size = 0x800, scoped, tag = 'output window, operand 0, single buffered']
    %8 = vsyncpa [#allocation3], 0
    %9 = vsyncpa [#allocation6], 0
    %10 = vsyncpa [#allocation4], 0
    // Predicated region
    $region2: #{tpu_custom_call.1} parent=1 // pred_check
      _
    $region3: #{tpu_custom_call.1} parent=1 // pred_check_branch
      %12 = sbr.rel (0) target = $region5
    $region4: #{tpu_custom_call.1} parent=1 // pred_region
      %14 = vsyncadd [#allocation3], 0
      %s15 = sshll.u32 %s0, 4
      %s16 = int_to_ptr.hbm [resolvable:$true] %s15
      %s17 = sshll.u32 [#allocation2], 4
      %s18 = int_to_ptr.vmem [resolvable:$true] %s17
      %23 = dma.hbm_to_vmem [thread:$0]  %s16, 64, %s18, [#allocation3], 32, 32, 2
    $region5: #{tpu_custom_call.1} parent=1 // pred_fallthru
      _
    // Predicated region
    $region6: #{tpu_custom_call.1} parent=1 // pred_check
      _
    $region7: #{tpu_custom_call.1} parent=1 // pred_check_branch
      %25 = sbr.rel (0) target = $region9
    $region8: #{tpu_custom_call.1} parent=1 // pred_region
      %27 = vsyncadd [#allocation6], 0
      %s29 = sshll.u32 %s1, 4
      %s30 = int_to_ptr.hbm [resolvable:$true] %s29
      %s31 = sshll.u32 [#allocation5], 4
      %s32 = int_to_ptr.vmem [resolvable:$true] %s31
      %34 = dma.hbm_to_vmem [thread:$0]  %s30, 32, %s32, [#allocation6]
    $region9: #{tpu_custom_call.1} parent=1 // pred_fallthru
      _
    // Predicated region
    $region10: #{tpu_custom_call.1} parent=1 // pred_check
      _
    $region11: #{tpu_custom_call.1} parent=1 // pred_check_branch
      %36 = sbr.rel (0) target = $region13
    $region12: #{tpu_custom_call.1} parent=1 // pred_region
      %38 = vsyncadd [#allocation6], 0
      %s39 = sshll.u32 %s2, 4
      %s40 = int_to_ptr.hbm [resolvable:$true] %s39
      %s41 = sshll.u32 [#allocation7], 4
      %s42 = int_to_ptr.vmem [resolvable:$true] %s41
      %47 = dma.hbm_to_vmem [thread:$0]  %s40, 32, %s42, [#allocation6], 16, 16, 1
    $region13: #{tpu_custom_call.1} parent=1 // pred_fallthru
      _
    // Predicated region
    $region14: #{tpu_custom_call.1} parent=1 // pred_check
      _
    $region15: #{tpu_custom_call.1} parent=1 // pred_check_branch
      %49 = sbr.rel (0) target = $region17
    $region16: #{tpu_custom_call.1} parent=1 // pred_region
      %51 = dma.done [#allocation3], 64
    $region17: #{tpu_custom_call.1} parent=1 // pred_fallthru
      _
    // Predicated region
    $region18: #{tpu_custom_call.1} parent=1 // pred_check
      _
    $region19: #{tpu_custom_call.1} parent=1 // pred_check_branch
      %53 = sbr.rel (0) target = $region21
    $region20: #{tpu_custom_call.1} parent=1 // pred_region
      %55 = dma.done [#allocation6], 32
    $region21: #{tpu_custom_call.1} parent=1 // pred_fallthru
      _
    // Predicated region
    $region22: #{tpu_custom_call.1} parent=1 // pred_check
      _
    $region23: #{tpu_custom_call.1} parent=1 // pred_check_branch
      %57 = sbr.rel (0) target = $region25
    $region24: #{tpu_custom_call.1} parent=1 // pred_region
      %59 = dma.done [#allocation6], 32
    $region25: #{tpu_custom_call.1} parent=1 // pred_fallthru
      _
    %v60 = vld [vmem:[#allocation2] sm:$0x3]
    %v61 = vld [vmem:[#allocation2 + $0x2] sm:$0x3]
    %v62 = vld [vmem:[#allocation5] sm:$0x3]
    %v63 = vadd.f32 %v60, %v62
    %v64 = vadd.f32 %v61, %v62
    %v65 = vld [vmem:[#allocation7] sm:$0x1]
    %v66 = vld [vmem:[#allocation7 + $0x1] sm:$0x1]
    %v69 = vperm.slane %v65, 0
    %v70 = vperm.slane %v66, 0
    %v73 = vadd.f32 %v63, %v69
    %v74 = vadd.f32 %v64, %v70
    %75 = vst [vmem:[#allocation8] sm:$0x3] %v73
    %76 = vst [vmem:[#allocation8 + $0x2] sm:$0x3] %v74
    // Predicated region
    $region26: #{tpu_custom_call.1} parent=1 // pred_check
      _
    $region27: #{tpu_custom_call.1} parent=1 // pred_check_branch
      %78 = sbr.rel (0) target = $region29
    $region28: #{tpu_custom_call.1} parent=1 // pred_region
      %80 = vsyncadd [#allocation4], 0
      %s81 = sshll.u32 [#allocation8], 4
      %s82 = int_to_ptr.vmem [resolvable:$true] %s81
      %s83 = sshll.u32 %s3, 4
      %s84 = int_to_ptr.hbm [resolvable:$true] %s83
      %89 = dma.vmem_to_hbm [thread:$0]  %s82, 64, %s84, [#allocation4], 32, 32, 2
    $region29: #{tpu_custom_call.1} parent=1 // pred_fallthru
      _
    // Predicated region
    $region30: #{tpu_custom_call.1} parent=1 // pred_check
      _
    $region31: #{tpu_custom_call.1} parent=1 // pred_check_branch
      %91 = sbr.rel (0) target = $region33
    $region32: #{tpu_custom_call.1} parent=1 // pred_region
      %93 = dma.done [#allocation4], 64
    $region33: #{tpu_custom_call.1} parent=1 // pred_fallthru
      _
    %94 = vsyncpa [#allocation3], 1
    %95 = vsyncpa [#allocation6], 1
    %96 = vsyncpa [#allocation4], 1

</llo_original>
